<compile_context>
chip_gen: v5e
topology: v5e:2x2
jax: 0.10.0
libtpu: 0.0.40
codegen_flags: <defaults>
</compile_context>

<pallas_src>
import functools

import numpy as np
import jax
import jax.numpy as jnp
from jax.experimental import pallas as pl
from jax.experimental.pallas import tpu as pltpu

_MULT = 73244475
_LANE = 128


def _salt_const(salt: int) -> int:
    """Scalar xor constant of salted_mueller_hash (low 32 bits, signed),
    matching int32 tensor semantics of the reference."""
    s = ((salt >> 16) ^ salt) * _MULT
    s = ((s >> 16) ^ s) * _MULT
    v = ((s >> 16) ^ s) & 0xFFFFFFFF
    if v >= 2 ** 31:
        v -= 2 ** 32
    return int(v)


def _bloom_embed_kernel(x_ref, lut_ref, o_ref, *, salts, lut_size, pow2):
    digests = len(salts)
    big_k = digests * lut_size
    tile_n = x_ref.shape[0]

    lut = lut_ref[...]                                  # (digests*lut_size, embed_pad)

    # ---- batched salted mueller hash for all digests at once ---------------
    d_iota = jax.lax.broadcasted_iota(jnp.int32, (tile_n, digests), 1)
    salt_b = jnp.full((tile_n, digests), salts[0], jnp.int32)
    for d in range(1, digests):
        salt_b = jnp.where(d_iota == d, jnp.int32(salts[d]), salt_b)

    # int32 wrap-around semantics (arithmetic >>, wrapping *, xor) == torch int32
    k = x_ref[...] ^ salt_b                             # (tile_n, digests)
    mult = jnp.int32(_MULT)
    k = ((k >> 16) ^ k) * mult
    k = ((k >> 16) ^ k) * mult
    k = (k >> 16) ^ k

    if pow2:
        idx = k & jnp.int32(lut_size - 1)               # exact floor-mod for pow2 divisor
    else:
        idx = k % jnp.int32(lut_size)                   # jnp % -> nonnegative (floor mod)
    gidx = idx + d_iota * jnp.int32(lut_size)           # column in block-diagonal LUT

    # ---- fused one-hot gather: one matmul, one wide lane-dense store -------
    col = jax.lax.broadcasted_iota(jnp.int32, (tile_n, big_k), 1)
    onehot = None
    for d in range(digests):
        hit = col == gidx[:, d:d + 1]                   # exactly one hit in block d
        onehot = hit if onehot is None else (onehot | hit)
    onehot = onehot.astype(lut.dtype)

    o_ref[...] = jnp.dot(onehot, lut,
                         preferred_element_type=jnp.float32).astype(o_ref.dtype)


def bloom_embed(x, lut, digests: int, *, tile_n: int = 1024):
    """x: (batch, seq) int32 ; lut: (lut_size, key_dim) ; -> (batch, seq, key_dim*digests)."""
    B, S = x.shape
    lut_size, key_dim = lut.shape
    embed_dim = key_dim * digests
    embed_pad = pl.cdiv(embed_dim, _LANE) * _LANE       # lane-dense output width
    n_tok = B * S
    itemsize = np.dtype(lut.dtype).itemsize

    # Tile sizing: large tiles amortize per-step overhead; cap so the footprint
    # stays well under the 32 MiB scoped-VMEM default (safe on v5e/v6e/v7x).
    tile_n = max(8, min(tile_n, pl.cdiv(n_tok, 8) * 8))

    def vmem_est(t):
        return (2 * t * _LANE * 4                               # id tiles (lane-padded), 2 bufs
                + 2 * t * embed_pad * itemsize                  # output tiles, 2 bufs
                + 2 * digests * lut_size * embed_pad * itemsize # resident block-diag LUT
                + 2 * t * digests * lut_size * 4)               # one-hot / matmul temporaries

    while tile_n > 8 and vmem_est(tile_n) > 24 * 1024 * 1024:
        tile_n = max(8, tile_n // 2)
    tile_n = pl.cdiv(tile_n, 8) * 8

    n_pad = pl.cdiv(n_tok, tile_n) * tile_n
    xf = x.reshape(n_tok).astype(jnp.int32)
    xf = jnp.pad(xf, (0, n_pad - n_tok)).reshape(n_pad, 1)

    # Block-diagonal LUT: digest d's table lives in rows [d*lut_size, (d+1)*lut_size)
    # and columns [d*key_dim, (d+1)*key_dim); padding columns up to embed_pad are zero.
    big_lut = jnp.zeros((digests * lut_size, embed_pad), lut.dtype)
    for d in range(digests):
        big_lut = big_lut.at[d * lut_size:(d + 1) * lut_size,
                             d * key_dim:(d + 1) * key_dim].set(lut)

    salts = tuple(_salt_const(d) for d in range(digests))
    pow2 = (lut_size & (lut_size - 1)) == 0
    kernel = functools.partial(_bloom_embed_kernel, salts=salts,
                               lut_size=lut_size, pow2=pow2)

    out = pl.pallas_call(
        kernel,
        out_shape=jax.ShapeDtypeStruct((n_pad, embed_pad), lut.dtype),
        grid_spec=pltpu.PrefetchScalarGridSpec(
            num_scalar_prefetch=0,
            grid=(n_pad // tile_n,),
            in_specs=[
                pl.BlockSpec((tile_n, 1), lambda i: (i, 0)),            # token-id tile
                # Full block-diagonal LUT resident in VMEM (constant index_map
                # -> fetched once).  TODO(synk): for very large LUTs on v7x use
                # pipeline_mode=pl.Buffered(1) or keep the LUT in HBM (pl.ANY).
                pl.BlockSpec((digests * lut_size, embed_pad), lambda i: (0, 0)),
            ],
            out_specs=pl.BlockSpec((tile_n, embed_pad), lambda i: (i, 0)),
        ),
        compiler_params=pltpu.CompilerParams(dimension_semantics=("parallel",)),
    )(xf, big_lut)

    return out[:n_tok, :embed_dim].reshape(B, S, embed_dim)


# ---------------- pure-numpy reference (mirrors the torch module) ----------------
def _wrap_i32(v):
    return ((v + 2 ** 31) % (2 ** 32)) - 2 ** 31


def _ref_bloom_embed(x_np, lut_np, digests):
    lut_size, key_dim = lut_np.shape
    B, S = x_np.shape
    outs = []
    for d in range(digests):
        k = _wrap_i32(x_np.astype(np.int64) ^ _salt_const(d))
        for _ in range(2):
            k = _wrap_i32(_wrap_i32((k >> 16) ^ k) * _MULT)
        k = (k >> 16) ^ k
        idx = np.mod(k, lut_size).astype(np.int64)
        outs.append(lut_np[idx.reshape(-1)].reshape(B, S, key_dim))
    return np.concatenate(outs, axis=-1)


# TODO(synk): validate_overlap / key_usage_rate are __init__-time Python set/dict
# diagnostics (not part of forward()); not ported to Pallas.

if __name__ == "__main__":
    # Module config (small, consistent with BloomEmbed.__init__):
    lut_size, vocab_size, embed_dim, digests = 128, 50, 32, 2
    key_dim = embed_dim // digests
    batch, seq = 2, 8

    key = jax.random.PRNGKey(0)
    k_lut, k_x, k_x2 = jax.random.split(key, 3)
    # lut ~ Normal(0, 1/sqrt(embed_dim)), shape (lut_size, key_dim)
    lut = (jax.random.normal(k_lut, (lut_size, key_dim), dtype=jnp.float32)
           * (1.0 / np.sqrt(embed_dim)))
    x = jax.random.randint(k_x, (batch, seq), 0, vocab_size, dtype=jnp.int32)

    out = jax.block_until_ready(bloom_embed(x, lut, digests))
    ref = _ref_bloom_embed(np.asarray(x), np.asarray(lut), digests)
    np.testing.assert_allclose(np.asarray(out), ref, rtol=1e-6, atol=1e-6)
    assert out.shape == (batch, seq, embed_dim) and out.dtype == jnp.float32

    # Multi-tile + ragged-padding path (grid > 1, n_tok not a multiple of tile_n).
    x2 = jax.random.randint(k_x2, (3, 50), 0, vocab_size, dtype=jnp.int32)
    out2 = jax.block_until_ready(bloom_embed(x2, lut, digests, tile_n=64))
    ref2 = _ref_bloom_embed(np.asarray(x2), np.asarray(lut), digests)
    np.testing.assert_allclose(np.asarray(out2), ref2, rtol=1e-6, atol=1e-6)

    print("KERNEL_OK")
</pallas_src>

<mosaic_0001>
module attributes {stable_mosaic.version = 11 : i64} {
  func.func @_bloom_embed_kernel(%arg0: i32, %arg1: memref<16x1xi32, #tpu.memory_space<vmem>>, %arg2: memref<256x128xf32, #tpu.memory_space<vmem>>, %arg3: memref<16x128xf32, #tpu.memory_space<vmem>>) attributes {dimension_semantics = [#tpu.dimension_semantics<parallel>], iteration_bounds = array<i64: 1>, scalar_prefetch = 0 : i64, scratch_operands = 0 : i64, tpu.core_type = #tpu.core_type<tc>, window_params = [{transform_indices = @transform_0, window_bounds = array<i64: 16, 1>}, {pipeline_mode = #tpu.pipeline_mode<synchronous>, transform_indices = @transform_1, window_bounds = array<i64: 256, 128>}, {transform_indices = @transform_2, window_bounds = array<i64: 16, 128>}]} {
    %c0 = arith.constant 0 : index
    %c0_0 = arith.constant 0 : index
    %0 = vector.load %arg2[%c0, %c0_0] : memref<256x128xf32, #tpu.memory_space<vmem>>, vector<256x128xf32>
    %1 = tpu.iota {dimensions = array<i32: 1>} : vector<16x2xi32>
    %c0_i32 = arith.constant 0 : i32
    %2 = vector.broadcast %c0_i32 : i32 to vector<16x2xi32>
    %c1_i32 = arith.constant 1 : i32
    %3 = vector.broadcast %c1_i32 : i32 to vector<16x2xi32>
    %4 = arith.cmpi eq, %1, %3 : vector<16x2xi32>
    %c1040391079_i32 = arith.constant 1040391079 : i32
    %5 = vector.broadcast %c1040391079_i32 : i32 to vector<16x2xi32>
    %6 = arith.select %4, %5, %2 : vector<16x2xi1>, vector<16x2xi32>
    %c0_1 = arith.constant 0 : index
    %c0_2 = arith.constant 0 : index
    %7 = vector.load %arg1[%c0_1, %c0_2] : memref<16x1xi32, #tpu.memory_space<vmem>>, vector<16x1xi32>
    %8 = vector.broadcast %7 : vector<16x1xi32> to vector<16x2xi32>
    %9 = arith.xori %8, %6 : vector<16x2xi32>
    %c16_i32 = arith.constant 16 : i32
    %10 = vector.broadcast %c16_i32 : i32 to vector<16x2xi32>
    %11 = arith.shrsi %9, %10 : vector<16x2xi32>
    %12 = arith.xori %11, %9 : vector<16x2xi32>
    %c73244475_i32 = arith.constant 73244475 : i32
    %13 = vector.broadcast %c73244475_i32 : i32 to vector<16x2xi32>
    %14 = arith.muli %12, %13 : vector<16x2xi32>
    %c16_i32_3 = arith.constant 16 : i32
    %15 = vector.broadcast %c16_i32_3 : i32 to vector<16x2xi32>
    %16 = arith.shrsi %14, %15 : vector<16x2xi32>
    %17 = arith.xori %16, %14 : vector<16x2xi32>
    %c73244475_i32_4 = arith.constant 73244475 : i32
    %18 = vector.broadcast %c73244475_i32_4 : i32 to vector<16x2xi32>
    %19 = arith.muli %17, %18 : vector<16x2xi32>
    %c16_i32_5 = arith.constant 16 : i32
    %20 = vector.broadcast %c16_i32_5 : i32 to vector<16x2xi32>
    %21 = arith.shrsi %19, %20 : vector<16x2xi32>
    %22 = arith.xori %21, %19 : vector<16x2xi32>
    %c127_i32 = arith.constant 127 : i32
    %23 = vector.broadcast %c127_i32 : i32 to vector<16x2xi32>
    %24 = arith.andi %22, %23 : vector<16x2xi32>
    %c128_i32 = arith.constant 128 : i32
    %25 = vector.broadcast %c128_i32 : i32 to vector<16x2xi32>
    %26 = arith.muli %1, %25 : vector<16x2xi32>
    %27 = arith.addi %24, %26 : vector<16x2xi32>
    %28 = tpu.iota {dimensions = array<i32: 1>} : vector<16x256xi32>
    %29 = vector.extract_strided_slice %27 {offsets = [0, 0], sizes = [16, 1], strides = [1, 1]} : vector<16x2xi32> to vector<16x1xi32>
    %30 = vector.broadcast %29 : vector<16x1xi32> to vector<16x256xi32>
    %31 = arith.cmpi eq, %28, %30 : vector<16x256xi32>
    %32 = vector.extract_strided_slice %27 {offsets = [0, 1], sizes = [16, 1], strides = [1, 1]} : vector<16x2xi32> to vector<16x1xi32>
    %33 = vector.broadcast %32 : vector<16x1xi32> to vector<16x256xi32>
    %34 = arith.cmpi eq, %28, %33 : vector<16x256xi32>
    %35 = arith.ori %31, %34 : vector<16x256xi1>
    %36 = arith.extui %35 : vector<16x256xi1> to vector<16x256xi32>
    %37 = arith.sitofp %36 : vector<16x256xi32> to vector<16x256xf32>
    %cst = arith.constant dense<0.000000e+00> : vector<16x128xf32>
    %38 = tpu.matmul %37, %0, %cst {dimension_numbers = #tpu.dot_dimension_numbers<[1], [0], [0], [1], [0, 0, 1, 1], [], []>} : vector<16x256xf32>, vector<256x128xf32>, vector<16x128xf32> -> vector<16x128xf32>
    %c0_6 = arith.constant 0 : index
    %c0_7 = arith.constant 0 : index
    %39 = vector.load %arg3[%c0_6, %c0_7] : memref<16x128xf32, #tpu.memory_space<vmem>>, vector<16x128xf32>
    tpu.vector_store %arg3[%c0_6, %c0_7], %38 {strides = array<i32>} : memref<16x128xf32, #tpu.memory_space<vmem>>, vector<16x128xf32>,
    return
  }
  func.func @transform_0(%arg0: i32) -> (i32, i32) {
    %c0_i32 = arith.constant 0 : i32
    %c0_i32_0 = arith.constant 0 : i32
    return %arg0, %c0_i32 : i32, i32
  }
  func.func @transform_1(%arg0: i32) -> (i32, i32) {
    %c0_i32 = arith.constant 0 : i32
    %c0_i32_0 = arith.constant 0 : i32
    %c0_i32_1 = arith.constant 0 : i32
    return %c0_i32, %c0_i32_0 : i32, i32
  }
  func.func @transform_2(%arg0: i32) -> (i32, i32) {
    %c0_i32 = arith.constant 0 : i32
    %c0_i32_0 = arith.constant 0 : i32
    return %arg0, %c0_i32 : i32, i32
  }
}

</mosaic_0001>

<llo_original>
// kernel: tpu_custom_call.1
$region0: #{tpu_custom_call.1}
  #allocation0 [shape = 'u32[]', space=smem, size = 0x4, offset = 0x4, fixed_abs, tag = 'smem constant byte address 0x4 - core index']
  #allocation1 [shape = 'u32[72,128]{1,0:T(1,128)}', space=vmem, size = 0x9000, scoped, tag = 'internal scratch']
  %s0 = inlined_call_operand.vmem [shape: s32[16,1], index: 0, kind: input, shape index: {}]
  %s1 = inlined_call_operand.hbm [shape: f32[256,128], index: 1, kind: input, shape index: {}]
  %s2 = inlined_call_operand.hbm [shape: f32[16,128], index: 2, kind: output, shape index: {}]
  %s3 = sld [smem:[#allocation0]]
  $region22: #{tpu_custom_call.1} parent=0
    _
  %s5 = ssub.s32 1, %s3
  %s6 = scalar_select 0, %s5, %s3
  $region1: #{tpu_custom_call.1} parent=0
    #allocation2 [shape = 'u8[131072]{0}', space=vmem, size = 0x20000, scoped, tag = 'input window, operand 1, single buffered']
    #allocation3 [shape = 's32[1]{0}', space=sflag, size = 0x4, scoped, tag = 'scoped memory for tpu_custom_call.1']
    #allocation4 [shape = 's32[1]{0}', space=sflag, size = 0x4, scoped, tag = 'scoped memory for tpu_custom_call.1']
    #allocation5 [shape = 'u8[8192]{0}', space=vmem, size = 0x2000, scoped, tag = 'output window, operand 0, single buffered']
    %7 = vsyncpa [#allocation3], 0
    %8 = vsyncpa [#allocation4], 0
    // Predicated region
    $region2: #{tpu_custom_call.1} parent=1 // pred_check
      _
    $region3: #{tpu_custom_call.1} parent=1 // pred_check_branch
      %10 = sbr.rel (0) target = $region5
    $region4: #{tpu_custom_call.1} parent=1 // pred_region
      _
    $region5: #{tpu_custom_call.1} parent=1 // pred_fallthru
      _
    // Predicated region
    $region6: #{tpu_custom_call.1} parent=1 // pred_check
      _
    $region7: #{tpu_custom_call.1} parent=1 // pred_check_branch
      %12 = sbr.rel (0) target = $region9
    $region8: #{tpu_custom_call.1} parent=1 // pred_region
      %14 = vsyncadd [#allocation3], 0
      %s15 = sshll.u32 %s1, 4
      %s16 = int_to_ptr.hbm [resolvable:$true] %s15
      %s17 = sshll.u32 [#allocation2], 4
      %s18 = int_to_ptr.vmem [resolvable:$true] %s17
      %23 = dma.hbm_to_vmem [thread:$0]  %s16, 4096, %s18, [#allocation3], 128, 128, 8
    $region9: #{tpu_custom_call.1} parent=1 // pred_fallthru
      _
    // Predicated region
    $region10: #{tpu_custom_call.1} parent=1 // pred_check
      _
    $region11: #{tpu_custom_call.1} parent=1 // pred_check_branch
      %25 = sbr.rel (0) target = $region13
    $region12: #{tpu_custom_call.1} parent=1 // pred_region
      %27 = dma.done [#allocation3], 4096
    $region13: #{tpu_custom_call.1} parent=1 // pred_fallthru
      _
    %v28 = vld [vmem:[#allocation2] sm:$0xff]
    %v29 = vld [vmem:[#allocation2 + $0x8] sm:$0xff]
    %v30 = vld [vmem:[#allocation2 + $0x10] sm:$0xff]
    %v31 = vld [vmem:[#allocation2 + $0x18] sm:$0xff]
    %v32 = vld [vmem:[#allocation2 + $0x20] sm:$0xff]
    %v33 = vld [vmem:[#allocation2 + $0x28] sm:$0xff]
    %v34 = vld [vmem:[#allocation2 + $0x30] sm:$0xff]
    %v35 = vld [vmem:[#allocation2 + $0x38] sm:$0xff]
    %v36 = vld [vmem:[#allocation2 + $0x40] sm:$0xff]
    %v37 = vld [vmem:[#allocation2 + $0x48] sm:$0xff]
    %v38 = vld [vmem:[#allocation2 + $0x50] sm:$0xff]
    %v39 = vld [vmem:[#allocation2 + $0x58] sm:$0xff]
    %v40 = vld [vmem:[#allocation2 + $0x60] sm:$0xff]
    %v41 = vld [vmem:[#allocation2 + $0x68] sm:$0xff]
    %v42 = vld [vmem:[#allocation2 + $0x70] sm:$0xff]
    %v43 = vld [vmem:[#allocation2 + $0x78] sm:$0xff]
    %v44 = vld [vmem:[#allocation2 + $0x80] sm:$0xff]
    %v45 = vld [vmem:[#allocation2 + $0x88] sm:$0xff]
    %v46 = vld [vmem:[#allocation2 + $0x90] sm:$0xff]
    %v47 = vld [vmem:[#allocation2 + $0x98] sm:$0xff]
    %v48 = vld [vmem:[#allocation2 + $0xa0] sm:$0xff]
    %v49 = vld [vmem:[#allocation2 + $0xa8] sm:$0xff]
    %v50 = vld [vmem:[#allocation2 + $0xb0] sm:$0xff]
    %v51 = vld [vmem:[#allocation2 + $0xb8] sm:$0xff]
    %v52 = vld [vmem:[#allocation2 + $0xc0] sm:$0xff]
    %v53 = vld [vmem:[#allocation2 + $0xc8] sm:$0xff]
    %v54 = vld [vmem:[#allocation2 + $0xd0] sm:$0xff]
    %v55 = vld [vmem:[#allocation2 + $0xd8] sm:$0xff]
    %v56 = vld [vmem:[#allocation2 + $0xe0] sm:$0xff]
    %v57 = vld [vmem:[#allocation2 + $0xe8] sm:$0xff]
    %v58 = vld [vmem:[#allocation2 + $0xf0] sm:$0xff]
    %v59 = vld [vmem:[#allocation2 + $0xf8] sm:$0xff]
    %v60 = vlaneseq
    %v61 = vand.u32 %v60, 127
    %vm62 = vcmp.eq.s32.totalorder %v61, 1
    %v63 = vsel %vm62, 1040391079, 0
    %v64 = vld [vmem:[%s0] sm:$0xff]
    %v65 = vld [vmem:[%s0 + $0x8] sm:$0xff]
    %66 = vset.pattern.permute.xlu0 0
    %67 = vperm.xlu0 %66, %v64
    %v68 = vpop.permute.xlu0 %67
    %69 = vset.pattern.permute.xlu0 0
    %70 = vperm.xlu0 %69, %v65
    %v71 = vpop.permute.xlu0 %70
    %v72 = vxor.u32 %v68, %v63
    %v73 = vxor.u32 %v71, %v63
    %v74 = vshra.s32 %v72, 16
    %v75 = vshra.s32 %v73, 16
    %v76 = vxor.u32 %v74, %v72
    %v77 = vxor.u32 %v75, %v73
    %v78 = vmul.u32 %v76, 73244475
    %v79 = vmul.u32 %v77, 73244475
    %v80 = vshra.s32 %v78, 16
    %v81 = vshra.s32 %v79, 16
    %v82 = vxor.u32 %v80, %v78
    %v83 = vxor.u32 %v81, %v79
    %v84 = vmul.u32 %v82, 73244475
    %v85 = vmul.u32 %v83, 73244475
    %v86 = vshra.s32 %v84, 16
    %v87 = vshra.s32 %v85, 16
    %v88 = vxor.u32 %v86, %v84
    %v89 = vxor.u32 %v87, %v85
    %v90 = vand.u32 %v88, 127
    %v91 = vand.u32 %v89, 127
    %v92 = vmul.u32 %v61, 128
    %v93 = vadd.s32 %v90, %v92
    %v94 = vadd.s32 %v91, %v92
    %v95 = vadd.s32 %v61, 128
    %96 = vset.pattern.permute.xlu0 0
    %97 = vperm.xlu0 %96, %v93
    %v98 = vpop.permute.xlu0 %97
    %99 = vset.pattern.permute.xlu0 0
    %100 = vperm.xlu0 %99, %v94
    %v101 = vpop.permute.xlu0 %100
    %vm102 = vcmp.eq.s32.totalorder %v61, %v98
    %vm103 = vcmp.eq.s32.totalorder %v95, %v98
    %vm104 = vcmp.eq.s32.totalorder %v61, %v101
    %vm105 = vcmp.eq.s32.totalorder %v95, %v101
    %106 = vset.pattern.permute.xlu0 1
    %107 = vperm.xlu0 %106, %v93
    %v108 = vpop.permute.xlu0 %107
    %109 = vset.pattern.permute.xlu0 1
    %110 = vperm.xlu0 %109, %v94
    %v111 = vpop.permute.xlu0 %110
    %vm112 = vcmp.eq.s32.totalorder %v61, %v108
    %vm113 = vcmp.eq.s32.totalorder %v95, %v108
    %vm114 = vcmp.eq.s32.totalorder %v61, %v111
    %vm115 = vcmp.eq.s32.totalorder %v95, %v111
    %vm116 = vmor %vm102, %vm112
    %vm117 = vmor %vm103, %vm113
    %vm118 = vmor %vm104, %vm114
    %vm119 = vmor %vm105, %vm115
    %v120 = vsel %vm116, 1, 0
    %v121 = vsel %vm117, 1, 0
    %v122 = vsel %vm118, 1, 0
    %v123 = vsel %vm119, 1, 0
    %v124 = vcvt.s32.f32 %v120
    %v125 = vcvt.s32.f32 %v121
    %v126 = vcvt.s32.f32 %v122
    %v127 = vcvt.s32.f32 %v123
    %128 = vmatpush.msra.mxu0 %v43
    %129 = vmatpush.msra.mxu0 %v42
    %130 = vmatpush.msra.mxu0 %v41
    %131 = vmatpush.msra.mxu0 %v40
    %132 = vmatpush.msra.mxu0 %v39
    %133 = vmatpush.msra.mxu0 %v38
    %134 = vmatpush.msra.mxu0 %v37
    %135 = vmatpush.msra.mxu0 %v36
    %136 = vmatpush.msra.mxu0 %v35
    %137 = vmatpush.msra.mxu0 %v34
    %138 = vmatpush.msra.mxu0 %v33
    %139 = vmatpush.msra.mxu0 %v32
    %140 = vmatpush.msra.mxu0 %v31
    %141 = vmatpush.msra.mxu0 %v30
    %142 = vmatpush.msra.mxu0 %v29
    %143 = vmatpush.msra.mxu0 %v28
    %144 = vmatmul.f32.gmra.mxu0 %v124
    %v145 = vpop.f32.mrf.mxu0
    %v146 = vadd.f32 0.0, %v145
    %147 = vmatmul.f32.gmra.mxu0 %v126
    %v148 = vpop.f32.mrf.mxu0
    %v149 = vadd.f32 0.0, %v148
    %150 = vdwg.mxu0
    %151 = vmatpush.msra.mxu0 %v59
    %152 = vmatpush.msra.mxu0 %v58
    %153 = vmatpush.msra.mxu0 %v57
    %154 = vmatpush.msra.mxu0 %v56
    %155 = vmatpush.msra.mxu0 %v55
    %156 = vmatpush.msra.mxu0 %v54
    %157 = vmatpush.msra.mxu0 %v53
    %158 = vmatpush.msra.mxu0 %v52
    %159 = vmatpush.msra.mxu0 %v51
    %160 = vmatpush.msra.mxu0 %v50
    %161 = vmatpush.msra.mxu0 %v49
    %162 = vmatpush.msra.mxu0 %v48
    %163 = vmatpush.msra.mxu0 %v47
    %164 = vmatpush.msra.mxu0 %v46
    %165 = vmatpush.msra.mxu0 %v45
    %166 = vmatpush.msra.mxu0 %v44
    %167 = vmatmul.f32.gmra.mxu0 %v125
    %v168 = vpop.f32.mrf.mxu0
    %v169 = vadd.f32 %v146, %v168
    %170 = vmatmul.f32.gmra.mxu0 %v127
    %v171 = vpop.f32.mrf.mxu0
    %v172 = vadd.f32 %v149, %v171
    %173 = vdwg.mxu0
    %174 = vst [vmem:[#allocation5] sm:$0xff] %v169
    %175 = vst [vmem:[#allocation5 + $0x8] sm:$0xff] %v172
    // Predicated region
    $region14: #{tpu_custom_call.1} parent=1 // pred_check
      _
    $region15: #{tpu_custom_call.1} parent=1 // pred_check_branch
      %177 = sbr.rel (0) target = $region17
    $region16: #{tpu_custom_call.1} parent=1 // pred_region
      %179 = vsyncadd [#allocation4], 0
      %s180 = sshll.u32 [#allocation5], 4
      %s181 = int_to_ptr.vmem [resolvable:$true] %s180
      %s182 = sshll.u32 %s2, 4
      %s183 = int_to_ptr.hbm [resolvable:$true] %s182
      %188 = dma.vmem_to_hbm [thread:$0]  %s181, 256, %s183, [#allocation4], 128, 128, 8
    $region17: #{tpu_custom_call.1} parent=1 // pred_fallthru
      _
    // Predicated region
    $region18: #{tpu_custom_call.1} parent=1 // pred_check
      _
    $region19: #{tpu_custom_call.1} parent=1 // pred_check_branch
      %190 = sbr.rel (0) target = $region21
    $region20: #{tpu_custom_call.1} parent=1 // pred_region
      %192 = dma.done [#allocation4], 256
    $region21: #{tpu_custom_call.1} parent=1 // pred_fallthru
      _
    %193 = vsyncpa [#allocation3], 1
    %194 = vsyncpa [#allocation4], 1

</llo_original>
